<compile_context>
chip_gen: v5e
topology: v5e:2x2
jax: 0.10.0
libtpu: 0.0.40
codegen_flags: <defaults>
</compile_context>

<pallas_src>
import functools

import jax
import jax.numpy as jnp
from jax.experimental import pallas as pl
from jax.experimental.pallas import tpu as pltpu


def _round_up(x, m):
    return ((x + m - 1) // m) * m


@functools.lru_cache(maxsize=None)
def _vmem_limit_bytes():
    """Scoped-VMEM limit: generous on 128 MiB parts (v5e/v6e/v5p), conservative on
    v7x (64 MiB physical) and unknown chips."""
    try:
        kind = jax.devices()[0].device_kind.lower()
    except Exception:
        kind = ""
    if "v5" in kind or "v6" in kind:
        return 96 * 1024 * 1024
    return 32 * 1024 * 1024


# -----------------------------------------------------------------------------
# Kernel 1: fused  [backbone 1x1 projection]  ->  [BN + ReLU + 1x1 conv head]
#
#   BN scale/shift and the backbone bias are folded into (bbw, shift) by the
#   wrapper, so the kernel body is:  relu(x @ bbw + shift) @ hw + hb
#
#   x:     (tm, Cin) bf16  (ReLU'd + cast in the wrapper)
#   bbw:   (Cin, F)  bf16      shift: (1, F)  f32
#   hw:    (F, Kp)   bf16      hb:    (1, Kp) f32   (Kp = classes padded -> 128)
#   out:   (tm, Kp)  bf16      (lane-dense store)
# -----------------------------------------------------------------------------
def _fused_head_kernel(x_ref, bbw_ref, shift_ref, hw_ref, hb_ref, o_ref):
    feats = jnp.dot(x_ref[...], bbw_ref[...], preferred_element_type=jnp.float32)
    y = jnp.maximum(feats + shift_ref[...], 0.0).astype(jnp.bfloat16)
    acc = jnp.dot(y, hw_ref[...], preferred_element_type=jnp.float32) + hb_ref[...]
    o_ref[...] = acc.astype(o_ref.dtype)


def fused_backbone_head(x2d, bbw, shift, head_w, head_b, *, out_dtype=jnp.bfloat16):
    M, Cin = x2d.shape
    F = bbw.shape[1]
    Kp = head_w.shape[1]

    # Row tile: multiple of 16 (bf16 sublane packing), capped at 512, and capped at
    # cdiv(M, 4) so the grid has >= 4 steps (>= 2 per TensorCore on v7x megacore).
    if M <= 16:
        tm = M
    else:
        tm = min(512, _round_up(pl.cdiv(M, 4), 16))
    # No padding of x2d: the ragged last block (if any) is handled by Pallas.
    # Rows are strictly independent and boundary writes are masked, so the
    # garbage rows of a partial block never reach HBM.
    grid = (pl.cdiv(M, tm),)

    out_bytes = jnp.dtype(out_dtype).itemsize
    flops = 2 * M * (Cin * F + F * Kp)
    bytes_accessed = (M * Cin * 2 + M * Kp * out_bytes
                      + Cin * F * 2 + F * Kp * 2 + 4 * (F + Kp))

    # TODO(synk): single-buffer the grid-constant weight operands
    # (pipeline_mode=pl.Buffered(1)) once that path is verified on all targets.
    return pl.pallas_call(
        _fused_head_kernel,
        out_shape=jax.ShapeDtypeStruct((M, Kp), out_dtype),
        grid=grid,
        in_specs=[
            pl.BlockSpec((tm, Cin), lambda i: (i, 0)),
            pl.BlockSpec((Cin, F), lambda i: (0, 0)),
            pl.BlockSpec((1, F), lambda i: (0, 0)),
            pl.BlockSpec((F, Kp), lambda i: (0, 0)),
            pl.BlockSpec((1, Kp), lambda i: (0, 0)),
        ],
        out_specs=pl.BlockSpec((tm, Kp), lambda i: (i, 0)),
        compiler_params=pltpu.CompilerParams(
            dimension_semantics=("parallel",),
            vmem_limit_bytes=_vmem_limit_bytes()),
        cost_estimate=pl.CostEstimate(flops=flops, transcendentals=0,
                                      bytes_accessed=bytes_accessed),
    )(x2d, bbw, shift, head_w, head_b)


# -----------------------------------------------------------------------------
# Kernel 2: bilinear upsample (align_corners=False).
#   Grid = (plane blocks, H tiles).  Per grid step:
#     1) per-plane H-interp on the SMALL inputs:   A_tile (tH,Hf) @ x[p] (Hf,Wf)
#     2) ONE lane-dense W-interp matmul:           (P*tH, Wf) @ (Wf, W)
#     3) single contiguous store of the (P, tH, W) output block.
# -----------------------------------------------------------------------------
def _bilinear_upsample_kernel(x_ref, a_ref, bt_ref, o_ref):
    P, tH, W = o_ref.shape
    a = a_ref[...]                                              # (tH, Hf) bf16
    rows = [jnp.dot(a, x_ref[p].astype(jnp.bfloat16),
                    preferred_element_type=jnp.float32).astype(jnp.bfloat16)
            for p in range(P)]                                  # each (tH, Wf), small
    y = jnp.concatenate(rows, axis=0)                           # (P*tH, Wf) bf16
    out = jnp.dot(y, bt_ref[...], preferred_element_type=jnp.float32)  # (P*tH, W)
    o_ref[...] = out.reshape(P, tH, W).astype(o_ref.dtype)


def _choose_upsample_tiles(NK, Hf, Wf, H, W, out_bytes, budget, plane_block=8):
    """Pick (P planes per step, tH output rows per step) under a VMEM budget."""
    def cost(P, tH):
        return (2 * P * tH * W * out_bytes      # double-buffered output block
                + P * tH * W * 4                # f32 matmul result before the cast
                + P * tH * Wf * 2               # concatenated bf16 intermediate
                + 2 * P * Hf * Wf * 2           # double-buffered input planes
                + 2 * tH * Hf * 2               # double-buffered A tile
                + 2 * Wf * W * 2)               # double-buffered Bt

    # Candidate H tiles: full H first, then shrinking multiples of 16.
    cands = [H]
    t = H // 2
    while t >= 16:
        t16 = _round_up(t, 16)
        if t16 < H and t16 not in cands:
            cands.append(t16)
        t //= 2
    if H > 16 and 16 not in cands:
        cands.append(16)

    P = max(1, min(plane_block, NK))
    while P > 1 and all(cost(P, t) > budget for t in cands):
        P -= 1
    tH = next((t for t in cands if cost(P, t) <= budget), cands[-1])
    # v7x megacore: keep >= 4 total grid steps when there is enough work.
    if pl.cdiv(NK, P) * pl.cdiv(H, tH) < 4 and NK >= 4:
        P = max(1, min(P, NK // 4))
    return P, tH


def bilinear_upsample(planes, A, Bt, *, out_dtype=jnp.float32, plane_block=8):
    NK, Hf, Wf = planes.shape
    H, W = A.shape[0], Bt.shape[1]

    limit = _vmem_limit_bytes()
    out_bytes = jnp.dtype(out_dtype).itemsize
    P, tH = _choose_upsample_tiles(NK, Hf, Wf, H, W, out_bytes,
                                   budget=limit - 8 * 1024 * 1024,
                                   plane_block=plane_block)
    # No padding / trailing slice: ragged plane / H blocks are masked on write
    # (planes and output rows are independent of each other).
    grid = (pl.cdiv(NK, P), pl.cdiv(H, tH))

    flops = 2 * NK * H * Wf * (Hf + W)
    bytes_accessed = (NK * Hf * Wf * 2 + NK * H * W * out_bytes
                      + (H * Hf + Wf * W) * 2)

    # TODO(synk): on v5e with very large downsample factors (Hf > ~400) the dense
    # matmul interpolation can become MXU-bound; a 2-tap VPU version (pltpu.roll)
    # would be cheaper there.
    return pl.pallas_call(
        _bilinear_upsample_kernel,
        out_shape=jax.ShapeDtypeStruct((NK, H, W), out_dtype),
        grid=grid,
        in_specs=[
            pl.BlockSpec((P, Hf, Wf), lambda i, h: (i, 0, 0)),
            pl.BlockSpec((tH, Hf), lambda i, h: (h, 0)),
            pl.BlockSpec((Wf, W), lambda i, h: (0, 0)),
        ],
        out_specs=pl.BlockSpec((P, tH, W), lambda i, h: (i, h, 0)),
        compiler_params=pltpu.CompilerParams(
            dimension_semantics=("parallel", "parallel"),
            vmem_limit_bytes=limit),
        cost_estimate=pl.CostEstimate(flops=flops, transcendentals=0,
                                      bytes_accessed=bytes_accessed),
    )(planes, A, Bt)


def bilinear_matrix(out_size, in_size):
    """Interpolation matrix matching F.interpolate(mode='bilinear', align_corners=False)."""
    scale = in_size / out_size
    i = jnp.arange(out_size, dtype=jnp.float32)
    src = jnp.clip((i + 0.5) * scale - 0.5, 0.0, float(in_size - 1))
    i0 = jnp.floor(src).astype(jnp.int32)
    i1 = jnp.minimum(i0 + 1, in_size - 1)
    frac = src - i0.astype(jnp.float32)
    m = jnp.zeros((out_size, in_size), jnp.float32)
    rows = jnp.arange(out_size)
    m = m.at[rows, i0].add(1.0 - frac)
    m = m.at[rows, i1].add(frac)
    return m


# -----------------------------------------------------------------------------
# SemsegModel forward
# -----------------------------------------------------------------------------
class SemsegParams:
    """Deterministic parameters (shapes follow the PyTorch module __init__)."""

    def __init__(self, key, in_ch, num_features, num_classes, eps=1e-5):
        ks = jax.random.split(key, 6)
        # synthetic backbone: 1x1 projection in_ch -> num_features
        self.bb_w = jax.random.normal(ks[0], (in_ch, num_features), jnp.float32) * 0.1
        self.bb_b = jax.random.normal(ks[1], (1, num_features), jnp.float32) * 0.1
        # logits head = _BNReluConv(num_features, num_classes, k=1, bias=True)
        gamma = 1.0 + 0.1 * jax.random.normal(ks[2], (num_features,), jnp.float32)
        beta = 0.1 * jax.random.normal(ks[3], (num_features,), jnp.float32)
        r_mean = 0.1 * jax.random.normal(ks[4], (num_features,), jnp.float32)
        r_var = jnp.abs(0.1 * jax.random.normal(ks[5], (num_features,), jnp.float32)) + 0.5
        scale = gamma / jnp.sqrt(r_var + eps)
        self.bn_scale = scale.reshape(1, num_features)
        self.bn_shift = (beta - r_mean * scale).reshape(1, num_features)
        kw, kb = jax.random.split(jax.random.fold_in(key, 7))
        # PyTorch Conv2d weight is (out, in, 1, 1); stored here as (in, out)
        self.head_w = jax.random.normal(kw, (num_features, num_classes), jnp.float32) * 0.1
        self.head_b = jax.random.normal(kb, (1, num_classes), jnp.float32) * 0.1


@functools.partial(jax.jit, static_argnums=(2, 3, 4, 5))
def semseg_forward(image_nchw, params_flat, num_features, num_classes, pool,
                   logits_dtype=jnp.float32):
    bb_w, bb_b, bn_scale, bn_shift, head_w, head_b = params_flat
    N, C_in, H, W = image_nchw.shape
    Hf, Wf = H // pool, W // pool
    F = num_features
    Kp = max(128, _round_up(num_classes, 128))   # lane-dense head output

    # --- synthetic backbone stem: avg pool + ReLU, cast to bf16 (fused by XLA) ---
    # TODO(synk): fold the avg-pool into the fused Pallas kernel; kept in XLA
    # because the NCHW image has only a handful of channels (lane-sparse in-kernel).
    x = jnp.transpose(image_nchw, (0, 2, 3, 1))                       # NHWC
    x = x.reshape(N, Hf, pool, Wf, pool, C_in).mean(axis=(2, 4))      # (N,Hf,Wf,Cin)
    x2d = jnp.maximum(x, 0.0).reshape(N * Hf * Wf, C_in).astype(jnp.bfloat16)

    # --- fold backbone bias + BatchNorm into the projection weights (trace time) ---
    bbw_eff = (bb_w * bn_scale).astype(jnp.bfloat16)                  # (Cin, F)
    shift_eff = bb_b * bn_scale + bn_shift                            # (1, F) f32
    head_w_p = (jnp.zeros((F, Kp), jnp.float32)
                .at[:, :num_classes].set(head_w).astype(jnp.bfloat16))
    head_b_p = jnp.zeros((1, Kp), jnp.float32).at[:, :num_classes].set(head_b)

    # --- fused: backbone 1x1 proj -> BN -> ReLU -> head 1x1 conv (one kernel) ---
    logits2d = fused_backbone_head(x2d, bbw_eff, shift_eff, head_w_p, head_b_p)

    # small-feature-map slice/transpose only (bf16); upsampled output is NCHW.
    # TODO(synk): optional class-major kernel-1 output would make this a pure reshape.
    logits_small = logits2d[:, :num_classes].reshape(N, Hf, Wf, num_classes)
    planes = jnp.transpose(logits_small, (0, 3, 1, 2)).reshape(
        N * num_classes, Hf, Wf)

    # --- bilinear upsample (align_corners=False) to image size --------------------
    A = bilinear_matrix(H, Hf).astype(jnp.bfloat16)
    Bt = bilinear_matrix(W, Wf).T.astype(jnp.bfloat16)
    up = bilinear_upsample(planes, A, Bt, out_dtype=logits_dtype)     # (N*K, H, W)
    return up.reshape(N, num_classes, H, W)                           # NCHW logits


if __name__ == "__main__":
    N, C_in, H, W = 2, 4, 16, 16
    num_features, num_classes, pool = 32, 8, 4

    key = jax.random.PRNGKey(0)
    k_img, k_par = jax.random.split(key)
    image = jax.random.normal(k_img, (N, C_in, H, W), jnp.float32)

    p = SemsegParams(k_par, C_in, num_features, num_classes)
    params_flat = (p.bb_w, p.bb_b, p.bn_scale, p.bn_shift, p.head_w, p.head_b)

    logits = semseg_forward(image, params_flat, num_features, num_classes, pool)
    jax.block_until_ready(logits)
    assert logits.shape == (N, num_classes, H, W)
    print("KERNEL_OK")
</pallas_src>

<mosaic_0001>
module attributes {stable_mosaic.version = 11 : i64} {
  func.func @_fused_head_kernel(%arg0: i32, %arg1: memref<16x4xbf16, #tpu.memory_space<vmem>>, %arg2: memref<4x32xbf16, #tpu.memory_space<vmem>>, %arg3: memref<1x32xf32, #tpu.memory_space<vmem>>, %arg4: memref<32x128xbf16, #tpu.memory_space<vmem>>, %arg5: memref<1x128xf32, #tpu.memory_space<vmem>>, %arg6: memref<16x128xbf16, #tpu.memory_space<vmem>>) attributes {dimension_semantics = [#tpu.dimension_semantics<parallel>], iteration_bounds = array<i64: 2>, scalar_prefetch = 0 : i64, scratch_operands = 0 : i64, tpu.core_type = #tpu.core_type<tc>, window_params = [{transform_indices = @transform_0, window_bounds = array<i64: 16, 4>}, {pipeline_mode = #tpu.pipeline_mode<synchronous>, transform_indices = @transform_1, window_bounds = array<i64: 4, 32>}, {pipeline_mode = #tpu.pipeline_mode<synchronous>, transform_indices = @transform_2, window_bounds = array<i64: 1, 32>}, {pipeline_mode = #tpu.pipeline_mode<synchronous>, transform_indices = @transform_3, window_bounds = array<i64: 32, 128>}, {pipeline_mode = #tpu.pipeline_mode<synchronous>, transform_indices = @transform_4, window_bounds = array<i64: 1, 128>}, {transform_indices = @transform_5, window_bounds = array<i64: 16, 128>}]} {
    %c0 = arith.constant 0 : index
    %c0_0 = arith.constant 0 : index
    %0 = vector.load %arg1[%c0, %c0_0] : memref<16x4xbf16, #tpu.memory_space<vmem>>, vector<16x4xbf16>
    %c0_1 = arith.constant 0 : index
    %c0_2 = arith.constant 0 : index
    %1 = vector.load %arg2[%c0_1, %c0_2] : memref<4x32xbf16, #tpu.memory_space<vmem>>, vector<4x32xbf16>
    %cst = arith.constant dense<0.000000e+00> : vector<16x32xf32>
    %2 = tpu.matmul %0, %1, %cst {dimension_numbers = #tpu.dot_dimension_numbers<[1], [0], [0], [1], [0, 0, 1, 1], [], []>} : vector<16x4xbf16>, vector<4x32xbf16>, vector<16x32xf32> -> vector<16x32xf32>
    %c0_3 = arith.constant 0 : index
    %c0_4 = arith.constant 0 : index
    %3 = vector.load %arg3[%c0_3, %c0_4] : memref<1x32xf32, #tpu.memory_space<vmem>>, vector<1x32xf32>
    %4 = vector.broadcast %3 : vector<1x32xf32> to vector<16x32xf32>
    %5 = arith.addf %2, %4 : vector<16x32xf32>
    %cst_5 = arith.constant 0.000000e+00 : f32
    %6 = vector.broadcast %cst_5 : f32 to vector<16x32xf32>
    %7 = arith.maximumf %5, %6 : vector<16x32xf32>
    %8 = arith.truncf %7 : vector<16x32xf32> to vector<16x32xbf16>
    %c0_6 = arith.constant 0 : index
    %c0_7 = arith.constant 0 : index
    %9 = vector.load %arg4[%c0_6, %c0_7] : memref<32x128xbf16, #tpu.memory_space<vmem>>, vector<32x128xbf16>
    %cst_8 = arith.constant dense<0.000000e+00> : vector<16x128xf32>
    %10 = tpu.matmul %8, %9, %cst_8 {dimension_numbers = #tpu.dot_dimension_numbers<[1], [0], [0], [1], [0, 0, 1, 1], [], []>} : vector<16x32xbf16>, vector<32x128xbf16>, vector<16x128xf32> -> vector<16x128xf32>
    %c0_9 = arith.constant 0 : index
    %c0_10 = arith.constant 0 : index
    %11 = vector.load %arg5[%c0_9, %c0_10] : memref<1x128xf32, #tpu.memory_space<vmem>>, vector<1x128xf32>
    %12 = vector.broadcast %11 : vector<1x128xf32> to vector<16x128xf32>
    %13 = arith.addf %10, %12 : vector<16x128xf32>
    %14 = arith.truncf %13 : vector<16x128xf32> to vector<16x128xbf16>
    %c0_11 = arith.constant 0 : index
    %c0_12 = arith.constant 0 : index
    %15 = vector.load %arg6[%c0_11, %c0_12] : memref<16x128xbf16, #tpu.memory_space<vmem>>, vector<16x128xbf16>
    tpu.vector_store %arg6[%c0_11, %c0_12], %14 {strides = array<i32>} : memref<16x128xbf16, #tpu.memory_space<vmem>>, vector<16x128xbf16>,
    return
  }
  func.func @transform_0(%arg0: i32) -> (i32, i32) {
    %c0_i32 = arith.constant 0 : i32
    %c0_i32_0 = arith.constant 0 : i32
    return %arg0, %c0_i32 : i32, i32
  }
  func.func @transform_1(%arg0: i32) -> (i32, i32) {
    %c0_i32 = arith.constant 0 : i32
    %c0_i32_0 = arith.constant 0 : i32
    %c0_i32_1 = arith.constant 0 : i32
    return %c0_i32, %c0_i32_0 : i32, i32
  }
  func.func @transform_2(%arg0: i32) -> (i32, i32) {
    %c0_i32 = arith.constant 0 : i32
    %c0_i32_0 = arith.constant 0 : i32
    %c0_i32_1 = arith.constant 0 : i32
    return %c0_i32, %c0_i32_0 : i32, i32
  }
  func.func @transform_3(%arg0: i32) -> (i32, i32) {
    %c0_i32 = arith.constant 0 : i32
    %c0_i32_0 = arith.constant 0 : i32
    %c0_i32_1 = arith.constant 0 : i32
    return %c0_i32, %c0_i32_0 : i32, i32
  }
  func.func @transform_4(%arg0: i32) -> (i32, i32) {
    %c0_i32 = arith.constant 0 : i32
    %c0_i32_0 = arith.constant 0 : i32
    %c0_i32_1 = arith.constant 0 : i32
    return %c0_i32, %c0_i32_0 : i32, i32
  }
  func.func @transform_5(%arg0: i32) -> (i32, i32) {
    %c0_i32 = arith.constant 0 : i32
    %c0_i32_0 = arith.constant 0 : i32
    return %arg0, %c0_i32 : i32, i32
  }
}

module attributes {stable_mosaic.version = 11 : i64} {
  func.func @_bilinear_upsample_kernel(%arg0: i32, %arg1: i32, %arg2: memref<4x4x4xbf16, #tpu.memory_space<vmem>>, %arg3: memref<16x4xbf16, #tpu.memory_space<vmem>>, %arg4: memref<4x16xbf16, #tpu.memory_space<vmem>>, %arg5: memref<4x16x16xf32, #tpu.memory_space<vmem>>) attributes {dimension_semantics = [#tpu.dimension_semantics<parallel>, #tpu.dimension_semantics<parallel>], iteration_bounds = array<i64: 4, 1>, scalar_prefetch = 0 : i64, scratch_operands = 0 : i64, tpu.core_type = #tpu.core_type<tc>, window_params = [{transform_indices = @transform_0, window_bounds = array<i64: 4, 4, 4>}, {transform_indices = @transform_1, window_bounds = array<i64: 16, 4>}, {pipeline_mode = #tpu.pipeline_mode<synchronous>, transform_indices = @transform_2, window_bounds = array<i64: 4, 16>}, {transform_indices = @transform_3, window_bounds = array<i64: 4, 16, 16>}]} {
    %c0 = arith.constant 0 : index
    %c0_0 = arith.constant 0 : index
    %0 = vector.load %arg3[%c0, %c0_0] : memref<16x4xbf16, #tpu.memory_space<vmem>>, vector<16x4xbf16>
    %c0_1 = arith.constant 0 : index
    %c0_2 = arith.constant 0 : index
    %c0_3 = arith.constant 0 : index
    %1 = vector.load %arg2[%c0_1, %c0_2, %c0_3] : memref<4x4x4xbf16, #tpu.memory_space<vmem>>, vector<1x4x4xbf16>
    %2 = vector.shape_cast %1 : vector<1x4x4xbf16> to vector<4x4xbf16>
    %cst = arith.constant dense<0.000000e+00> : vector<16x4xf32>
    %3 = tpu.matmul %0, %2, %cst {dimension_numbers = #tpu.dot_dimension_numbers<[1], [0], [0], [1], [0, 0, 1, 1], [], []>} : vector<16x4xbf16>, vector<4x4xbf16>, vector<16x4xf32> -> vector<16x4xf32>
    %4 = arith.truncf %3 : vector<16x4xf32> to vector<16x4xbf16>
    %c1 = arith.constant 1 : index
    %c0_4 = arith.constant 0 : index
    %c0_5 = arith.constant 0 : index
    %5 = vector.load %arg2[%c1, %c0_4, %c0_5] : memref<4x4x4xbf16, #tpu.memory_space<vmem>>, vector<1x4x4xbf16>
    %6 = vector.shape_cast %5 : vector<1x4x4xbf16> to vector<4x4xbf16>
    %cst_6 = arith.constant dense<0.000000e+00> : vector<16x4xf32>
    %7 = tpu.matmul %0, %6, %cst_6 {dimension_numbers = #tpu.dot_dimension_numbers<[1], [0], [0], [1], [0, 0, 1, 1], [], []>} : vector<16x4xbf16>, vector<4x4xbf16>, vector<16x4xf32> -> vector<16x4xf32>
    %8 = arith.truncf %7 : vector<16x4xf32> to vector<16x4xbf16>
    %c2 = arith.constant 2 : index
    %c0_7 = arith.constant 0 : index
    %c0_8 = arith.constant 0 : index
    %9 = vector.load %arg2[%c2, %c0_7, %c0_8] : memref<4x4x4xbf16, #tpu.memory_space<vmem>>, vector<1x4x4xbf16>
    %10 = vector.shape_cast %9 : vector<1x4x4xbf16> to vector<4x4xbf16>
    %cst_9 = arith.constant dense<0.000000e+00> : vector<16x4xf32>
    %11 = tpu.matmul %0, %10, %cst_9 {dimension_numbers = #tpu.dot_dimension_numbers<[1], [0], [0], [1], [0, 0, 1, 1], [], []>} : vector<16x4xbf16>, vector<4x4xbf16>, vector<16x4xf32> -> vector<16x4xf32>
    %12 = arith.truncf %11 : vector<16x4xf32> to vector<16x4xbf16>
    %c3 = arith.constant 3 : index
    %c0_10 = arith.constant 0 : index
    %c0_11 = arith.constant 0 : index
    %13 = vector.load %arg2[%c3, %c0_10, %c0_11] : memref<4x4x4xbf16, #tpu.memory_space<vmem>>, vector<1x4x4xbf16>
    %14 = vector.shape_cast %13 : vector<1x4x4xbf16> to vector<4x4xbf16>
    %cst_12 = arith.constant dense<0.000000e+00> : vector<16x4xf32>
    %15 = tpu.matmul %0, %14, %cst_12 {dimension_numbers = #tpu.dot_dimension_numbers<[1], [0], [0], [1], [0, 0, 1, 1], [], []>} : vector<16x4xbf16>, vector<4x4xbf16>, vector<16x4xf32> -> vector<16x4xf32>
    %16 = arith.truncf %15 : vector<16x4xf32> to vector<16x4xbf16>
    %17 = tpu.concatenate %4, %8, %12, %16 in 0 : vector<16x4xbf16>, vector<16x4xbf16>, vector<16x4xbf16>, vector<16x4xbf16> -> vector<64x4xbf16>
    %c0_13 = arith.constant 0 : index
    %c0_14 = arith.constant 0 : index
    %18 = vector.load %arg4[%c0_13, %c0_14] : memref<4x16xbf16, #tpu.memory_space<vmem>>, vector<4x16xbf16>
    %cst_15 = arith.constant dense<0.000000e+00> : vector<64x16xf32>
    %19 = tpu.matmul %17, %18, %cst_15 {dimension_numbers = #tpu.dot_dimension_numbers<[1], [0], [0], [1], [0, 0, 1, 1], [], []>} : vector<64x4xbf16>, vector<4x16xbf16>, vector<64x16xf32> -> vector<64x16xf32>
    %20 = vector.shape_cast %19 : vector<64x16xf32> to vector<4x16x16xf32>
    %c0_16 = arith.constant 0 : index
    %c0_17 = arith.constant 0 : index
    %c0_18 = arith.constant 0 : index
    %21 = vector.load %arg5[%c0_16, %c0_17, %c0_18] : memref<4x16x16xf32, #tpu.memory_space<vmem>>, vector<4x16x16xf32>
    tpu.vector_store %arg5[%c0_16, %c0_17, %c0_18], %20 {strides = array<i32>} : memref<4x16x16xf32, #tpu.memory_space<vmem>>, vector<4x16x16xf32>,
    return
  }
  func.func @transform_0(%arg0: i32, %arg1: i32) -> (i32, i32, i32) {
    %c0_i32 = arith.constant 0 : i32
    %c0_i32_0 = arith.constant 0 : i32
    %c0_i32_1 = arith.constant 0 : i32
    return %arg0, %c0_i32, %c0_i32_0 : i32, i32, i32
  }
  func.func @transform_1(%arg0: i32, %arg1: i32) -> (i32, i32) {
    %c0_i32 = arith.constant 0 : i32
    %c0_i32_0 = arith.constant 0 : i32
    return %arg1, %c0_i32 : i32, i32
  }
  func.func @transform_2(%arg0: i32, %arg1: i32) -> (i32, i32) {
    %c0_i32 = arith.constant 0 : i32
    %c0_i32_0 = arith.constant 0 : i32
    %c0_i32_1 = arith.constant 0 : i32
    return %c0_i32, %c0_i32_0 : i32, i32
  }
  func.func @transform_3(%arg0: i32, %arg1: i32) -> (i32, i32, i32) {
    %c0_i32 = arith.constant 0 : i32
    %c0_i32_0 = arith.constant 0 : i32
    return %arg0, %arg1, %c0_i32 : i32, i32, i32
  }
}

</mosaic_0001>

<llo_original>
// kernel: semseg_forward.2
$region0: #{semseg_forward.2}
  #allocation0 [shape = 'u32[]', space=smem, size = 0x4, offset = 0x4, fixed_abs, tag = 'smem constant byte address 0x4 - core index']
  #allocation1 [shape = 'u32[72,128]{1,0:T(1,128)}', space=vmem, size = 0x9000, scoped, tag = 'internal scratch']
  %s0 = inlined_call_operand.vmem [shape: bf16[32,4], index: 0, kind: input, shape index: {}]
  %s1 = inlined_call_operand.vmem [shape: bf16[4,32], index: 1, kind: input, shape index: {}]
  %s2 = inlined_call_operand.vmem [shape: f32[1,32], index: 2, kind: input, shape index: {}]
  %s3 = inlined_call_operand.vmem [shape: bf16[32,128], index: 3, kind: input, shape index: {}]
  %s4 = inlined_call_operand.vmem [shape: f32[1,128], index: 4, kind: input, shape index: {}]
  %s5 = inlined_call_operand.vmem [shape: bf16[32,128], index: 5, kind: output, shape index: {}]
  %s6 = sld [smem:[#allocation0]]
  $region53: #{semseg_forward.2} parent=0
    _
  %s8 = ssub.s32 1, %s6
  %s9 = scalar_select 0, %s8, %s6
  loop: start=0, step=1, limit=4
  $region2: #{semseg_forward.2} parent=0 // loop_pre_header
    _
  $region3: #{semseg_forward.2} parent=0 // loop_header
    %s11 = sphi 0, %s15
    %p12 = scmp.ge.s32.totalorder %s11, 4
    %s21 = sphi 0, %s23
    %s24 = sphi 0, %s21
    %s25 = sphi 0, %s24
    %s41 = sphi 0, %s25
    %s45 = sphi 0, %s45
    %s47 = sphi 0, %s45
    %s48 = sphi 0, %s47
    %s62 = sphi 0, %s48
    %s66 = sphi 0, %s66
    %s68 = sphi 0, %s66
    %s69 = sphi 0, %s68
    %s83 = sphi 0, %s69
    %s87 = sphi 0, %s87
    %s89 = sphi 0, %s87
    %s90 = sphi 0, %s89
    %s104 = sphi 0, %s90
    %s108 = sphi 0, %s108
    %s110 = sphi 0, %s108
    %s111 = sphi 0, %s110
    %s125 = sphi 0, %s111
    %s131 = sphi 0, %s133
    %s134 = sphi 0, %s131
    %s135 = sphi 0, %s134
    %s151 = sphi 0, %s135
  $region4: #{semseg_forward.2} parent=0 // loop_header_branch
    %14 = sbr.rel (%p12) target = $region8
  $region5: #{semseg_forward.2} parent=0 // loop_body
    %s16 = ssub.s32 %s11, 1
    %s17 = ssub.s32 %s11, 2
    %s18 = sadd.s32 %s11, 1
    %s19 = ssub.s32 %s11, %s18
    %p20 = scmp.eq.s32.totalorder %s19, 0
    %s22 = sadd.s32 %s21, 1
    %s23 = scalar_select %p20, %s21, %s22
    %p26 = pneg %p20
    %p27 = scmp.eq.s32.totalorder %s11, 1
    %p28 = por %p26, %p27
    %p29 = scmp.ne.s32.totalorder %s21, %s24
    %p30 = scmp.eq.s32.totalorder %s11, 0
    %p31 = por %p29, %p30
    %p32 = scmp.ne.s32.totalorder %s21, %s24
    %p33 = scmp.eq.s32.totalorder %s16, 1
    %p34 = por %p32, %p33
    %p35 = scmp.ne.s32.totalorder %s24, %s25
    %p36 = scmp.eq.s32.totalorder %s16, 0
    %p37 = por %p35, %p36
    %p38 = scmp.ne.s32.totalorder %s24, %s25
    %p39 = scmp.eq.s32.totalorder %s17, 1
    %p40 = por %p38, %p39
    %p42 = scmp.ne.s32.totalorder %s25, %s41
    %p43 = scmp.eq.s32.totalorder %s17, 0
    %p44 = por %p42, %p43
    %s46 = sadd.s32 %s45, 1
    %p49 = scmp.eq.s32.totalorder %s11, 1
    %p50 = scmp.ne.s32.totalorder %s45, %s47
    %p51 = scmp.eq.s32.totalorder %s11, 0
    %p52 = por %p50, %p51
    %p53 = scmp.ne.s32.totalorder %s45, %s47
    %p54 = scmp.eq.s32.totalorder %s16, 1
    %p55 = por %p53, %p54
    %p56 = scmp.ne.s32.totalorder %s47, %s48
    %p57 = scmp.eq.s32.totalorder %s16, 0
    %p58 = por %p56, %p57
    %p59 = scmp.ne.s32.totalorder %s47, %s48
    %p60 = scmp.eq.s32.totalorder %s17, 1
    %p61 = por %p59, %p60
    %p63 = scmp.ne.s32.totalorder %s48, %s62
    %p64 = scmp.eq.s32.totalorder %s17, 0
    %p65 = por %p63, %p64
    %s67 = sadd.s32 %s66, 1
    %p70 = scmp.eq.s32.totalorder %s11, 1
    %p71 = scmp.ne.s32.totalorder %s66, %s68
    %p72 = scmp.eq.s32.totalorder %s11, 0
    %p73 = por %p71, %p72
    %p74 = scmp.ne.s32.totalorder %s66, %s68
    %p75 = scmp.eq.s32.totalorder %s16, 1
    %p76 = por %p74, %p75
    %p77 = scmp.ne.s32.totalorder %s68, %s69
    %p78 = scmp.eq.s32.totalorder %s16, 0
    %p79 = por %p77, %p78
    %p80 = scmp.ne.s32.totalorder %s68, %s69
    %p81 = scmp.eq.s32.totalorder %s17, 1
    %p82 = por %p80, %p81
    %p84 = scmp.ne.s32.totalorder %s69, %s83
    %p85 = scmp.eq.s32.totalorder %s17, 0
    %p86 = por %p84, %p85
    %s88 = sadd.s32 %s87, 1
    %p91 = scmp.eq.s32.totalorder %s11, 1
    %p92 = scmp.ne.s32.totalorder %s87, %s89
    %p93 = scmp.eq.s32.totalorder %s11, 0
    %p94 = por %p92, %p93
    %p95 = scmp.ne.s32.totalorder %s87, %s89
    %p96 = scmp.eq.s32.totalorder %s16, 1
    %p97 = por %p95, %p96
    %p98 = scmp.ne.s32.totalorder %s89, %s90
    %p99 = scmp.eq.s32.totalorder %s16, 0
    %p100 = por %p98, %p99
    %p101 = scmp.ne.s32.totalorder %s89, %s90
    %p102 = scmp.eq.s32.totalorder %s17, 1
    %p103 = por %p101, %p102
    %p105 = scmp.ne.s32.totalorder %s90, %s104
    %p106 = scmp.eq.s32.totalorder %s17, 0
    %p107 = por %p105, %p106
    %s109 = sadd.s32 %s108, 1
    %p112 = scmp.eq.s32.totalorder %s11, 1
    %p113 = scmp.ne.s32.totalorder %s108, %s110
    %p114 = scmp.eq.s32.totalorder %s11, 0
    %p115 = por %p113, %p114
    %p116 = scmp.ne.s32.totalorder %s108, %s110
    %p117 = scmp.eq.s32.totalorder %s16, 1
    %p118 = por %p116, %p117
    %p119 = scmp.ne.s32.totalorder %s110, %s111
    %p120 = scmp.eq.s32.totalorder %s16, 0
    %p121 = por %p119, %p120
    %p122 = scmp.ne.s32.totalorder %s110, %s111
    %p123 = scmp.eq.s32.totalorder %s17, 1
    %p124 = por %p122, %p123
    %p126 = scmp.ne.s32.totalorder %s111, %s125
    %p127 = scmp.eq.s32.totalorder %s17, 0
    %p128 = por %p126, %p127
    %s129 = ssub.s32 %s11, %s18
    %p130 = scmp.eq.s32.totalorder %s129, 0
    %s132 = sadd.s32 %s131, 1
    %s133 = scalar_select %p130, %s131, %s132
    %p136 = pneg %p130
    %p137 = scmp.eq.s32.totalorder %s11, 1
    %p138 = por %p136, %p137
    %p139 = scmp.ne.s32.totalorder %s131, %s134
    %p140 = scmp.eq.s32.totalorder %s11, 0
    %p141 = por %p139, %p140
    %p142 = scmp.ne.s32.totalorder %s131, %s134
    %p143 = scmp.eq.s32.totalorder %s16, 1
    %p144 = por %p142, %p143
    %p145 = scmp.ne.s32.totalorder %s134, %s135
    %p146 = scmp.eq.s32.totalorder %s16, 0
    %p147 = por %p145, %p146
    %p148 = scmp.ne.s32.totalorder %s134, %s135
    %p149 = scmp.eq.s32.totalorder %s17, 1
    %p150 = por %p148, %p149
    %p152 = scmp.ne.s32.totalorder %s135, %s151
    %p153 = scmp.eq.s32.totalorder %s17, 0
    %p154 = por %p152, %p153
    %p155 = scmp.le.s32.totalorder 1, %s11
    %p156 = scmp.lt.s32.totalorder %s11, 3
    %p157 = pnand %p155, %p156
    %p158 = pneg %p157
    // Predicated region
    $region9: #{semseg_forward.2} parent=5 // pred_check
      _
    $region10: #{semseg_forward.2} parent=5 // pred_check_branch
      %160 = sbr.rel (%p157) target = $region12
    $region11: #{semseg_forward.2} parent=5 // pred_region
      %s161 = ssub.s32 %s11, 1
      // Predicated region
      $region13: #{semseg_forward.2} parent=11 // pred_check
        %p162 = pneg %p58
      $region14: #{semseg_forward.2} parent=11 // pred_check_branch
        %164 = sbr.rel (%p162) target = $region16
      $region15: #{semseg_forward.2} parent=11 // pred_region
        _
      $region16: #{semseg_forward.2} parent=11 // pred_fallthru
        _
      // Predicated region
      $region17: #{semseg_forward.2} parent=11 // pred_check
        %p165 = pneg %p79
      $region18: #{semseg_forward.2} parent=11 // pred_check_branch
        %167 = sbr.rel (%p165) target = $region20
      $region19: #{semseg_forward.2} parent=11 // pred_region
        _
      $region20: #{semseg_forward.2} parent=11 // pred_fallthru
        _
      // Predicated region
      $region21: #{semseg_forward.2} parent=11 // pred_check
        %p168 = pneg %p100
      $region22: #{semseg_forward.2} parent=11 // pred_check_branch
        %170 = sbr.rel (%p168) target = $region24
      $region23: #{semseg_forward.2} parent=11 // pred_region
        _
      $region24: #{semseg_forward.2} parent=11 // pred_fallthru
        _
      // Predicated region
      $region25: #{semseg_forward.2} parent=11 // pred_check
        %p171 = pneg %p121
      $region26: #{semseg_forward.2} parent=11 // pred_check_branch
        %173 = sbr.rel (%p171) target = $region28
      $region27: #{semseg_forward.2} parent=11 // pred_region
        _
      $region28: #{semseg_forward.2} parent=11 // pred_fallthru
        _
    $region12: #{semseg_forward.2} parent=5 // pred_fallthru
      _
    %p174 = scmp.lt.s32.totalorder %s11, 2
    // Predicated region
    $region29: #{semseg_forward.2} parent=5 // pred_check
      %p175 = pneg %p174
    $region30: #{semseg_forward.2} parent=5 // pred_check_branch
      %177 = sbr.rel (%p175) target = $region32
    $region31: #{semseg_forward.2} parent=5 // pred_region
      // Predicated region
      $region33: #{semseg_forward.2} parent=31 // pred_check
        %p178 = pneg %p31
      $region34: #{semseg_forward.2} parent=31 // pred_check_branch
        %180 = sbr.rel (%p178) target = $region36
      $region35: #{semseg_forward.2} parent=31 // pred_region
        %s181 = smul.u32 2, %s11
        %p182 = scmp.lt.s32.totalorder %s181, 3
        %s183 = scalar_select %p182, %s181, 3
        %s184 = smul.addr %s183, 4
        %s185 = scalar_lea.vmem %s0, %s184
        %s186 = smul.u32 2, %s11
      $region36: #{semseg_forward.2} parent=31 // pred_fallthru
        _
    $region32: #{semseg_forward.2} parent=5 // pred_fallthru
      _
    %p187 = scmp.le.s32.totalorder 1, %s11
    %p188 = scmp.lt.s32.totalorder %s11, 3
    %p189 = pnand %p187, %p188
    %p190 = pneg %p189
    // Predicated region
    $region37: #{semseg_forward.2} parent=5 // pred_check
      _
    $region38: #{semseg_forward.2} parent=5 // pred_check_branch
      %192 = sbr.rel (%p189) target = $region40
    $region39: #{semseg_forward.2} parent=5 // pred_region
      %s193 = ssub.s32 %s11, 1
      %s194 = smul.u32 2, %s16
      %p195 = scmp.lt.s32.totalorder %s194, 3
      %s196 = scalar_select %p195, %s194, 3
      %s197 = smul.addr %s196, 4
      %s198 = scalar_lea.vmem %s0, %s197
      %p199 = pneg %p37
      %p200 = pneg %p34
      %p201 = pneg %p58
      %p202 = pneg %p55
      %p203 = pneg %p79
      %p204 = pneg %p76
      %p205 = pneg %p100
      %p206 = pneg %p97
      %p207 = pneg %p121
      %p208 = pneg %p118
      %p209 = pneg %p147
      %p210 = pneg %p144
      %s211 = smul.u32 2, %s16
      %p212 = scmp.lt.s32.totalorder %s211, 3
      %s213 = scalar_select %p212, %s211, 3
      %s214 = smul.addr %s213, 4
      %s215 = scalar_lea.vmem %s5, %s214
      %s216 = smul.u32 2, %s16
      %p217 = scmp.lt.s32.totalorder %s216, 3
      %s218 = scalar_select %p217, %s216, 3
      %s219 = smul.addr %s218, 4
      %s220 = scalar_lea.vmem %s0, %s219
      %s221 = smul.u32 2, %s16
      %s222 = smul.u32 2, %s16
      %p223 = scmp.lt.s32.totalorder %s222, 3
      %s224 = scalar_select %p223, %s222, 3
      %s225 = smul.addr %s224, 4
      %s226 = scalar_lea.vmem %s5, %s225
      %s227 = smul.u32 2, %s16
      %v229 = vld [vmem:[%s220] sm:$0xf]
      %v230 = vld [vmem:[%s220 + $0x4] sm:$0xf]
      %v231 = vld [vmem:[%s1] sm:$0x3]
      %v232 = vld [vmem:[%s2] sm:$0x1]
      %v234 = vperm.slane %v232, 0
      %v238 = vunpack.c.l.b16 %v229
      %v239 = vunpack.c.l.b16 %v230
      %v240 = vpack.c.b16 %v239, %v238
      %vm241 = vcmask 31744
      %v243 = vsel %vm241, %v240, 0
      %vm245 = vcmask 1041408
      %v247 = vsel %vm245, %v231, 0
      %249 = vmatpush.bf16.msra.mxu0 0
      %250 = vmatpush.bf16.msra.mxu0 0
      %251 = vmatpush.bf16.msra.mxu0 0
      %252 = vmatpush.bf16.msra.mxu0 0
      %253 = vmatpush.bf16.msra.mxu0 0
      %254 = vmatpush.bf16.msra.mxu0 0
      %255 = vmatpush.bf16.msra.mxu0 0
      %256 = vmatpush.bf16.msra.mxu0 %v247
      %257 = vmatmul.bf16.gmra.mxu0 %v243
      %v258 = vpop.f32.mrf.mxu0
      %v259 = vadd.f32 %v234, %v258
      %v260 = vpop.f32.mrf.mxu0
      %v261 = vadd.f32 %v234, %v260
      %262 = vdwg.mxu0
      %v263 = vmax.f32 %v259, 0.0
      %v264 = vmax.f32 %v261, 0.0
      %v265 = vpack.c.bf16 %v264, %v263
      %v266 = vld [vmem:[%s3] sm:$0xf]
      %v267 = vld [vmem:[%s3 + $0x4] sm:$0xf]
      %v268 = vld [vmem:[%s3 + $0x8] sm:$0xf]
      %v269 = vld [vmem:[%s3 + $0xc] sm:$0xf]
      %v270 = vld [vmem:[%s4] sm:$0x1]
      %v272 = vperm.slane %v270, 0
      %v278 = vunpack.c.l.b16 %v266
      %v279 = vunpack.c.l.b16 %v267
      %v280 = vunpack.c.l.b16 %v268
      %v281 = vunpack.c.l.b16 %v269
      %v282 = vpack.c.b16 %v279, %v278
      %v283 = vpack.c.b16 %v281, %v280
      %vm286 = vcmask 261120
      %v288 = vsel %vm286, %v265, 0
      %290 = vmatpush.bf16.msra.mxu0 0
      %291 = vmatpush.bf16.msra.mxu0 0
      %292 = vmatpush.bf16.msra.mxu0 0
      %293 = vmatpush.bf16.msra.mxu0 0
      %294 = vmatpush.bf16.msra.mxu0 0
      %295 = vmatpush.bf16.msra.mxu0 0
      %296 = vmatpush.bf16.msra.mxu0 %v283
      %297 = vmatpush.bf16.msra.mxu0 %v282
      %298 = vmatmul.bf16.gmra.mxu0 %v288
      %v299 = vpop.f32.mrf.mxu0
      %v300 = vadd.f32 %v272, %v299
      %v301 = vpop.f32.mrf.mxu0
      %v302 = vadd.f32 %v272, %v301
      %303 = vdwg.mxu0
      %v304 = vpack.c.bf16 %v300, %v300
      %v305 = vpack.c.bf16 %v302, %v302
      %306 = vst [vmem:[%s226] sm:$0xf] %v304
      %307 = vst [vmem:[%s226 + $0x4] sm:$0xf] %v305
      %s308 = smul.u32 2, %s16
      %p309 = scmp.lt.s32.totalorder %s308, 3
      %s310 = scalar_select %p309, %s308, 3
      %s311 = smul.addr %s310, 4
      %s312 = scalar_lea.vmem %s5, %s311
      // Predicated region
      $region41: #{semseg_forward.2} parent=39 // pred_check
        %p313 = pneg %p144
      $region42: #{semseg_forward.2} parent=39 // pred_check_branch
        %315 = sbr.rel (%p313) target = $region44
      $region43: #{semseg_forward.2} parent=39 // pred_region
        %s316 = smul.u32 2, %s16
      $region44: #{semseg_forward.2} parent=39 // pred_fallthru
        _
    $region40: #{semseg_forward.2} parent=5 // pred_fallthru
      _
    %p317 = scmp.le.s32.totalorder 2, %s11
    // Predicated region
    $region45: #{semseg_forward.2} parent=5 // pred_check
      %p318 = pneg %p317
    $region46: #{semseg_forward.2} parent=5 // pred_check_branch
      %320 = sbr.rel (%p318) target = $region48
    $region47: #{semseg_forward.2} parent=5 // pred_region
      %s321 = ssub.s32 %s11, 2
      // Predicated region
      $region49: #{semseg_forward.2} parent=47 // pred_check
        %p322 = pneg %p150
      $region50: #{semseg_forward.2} parent=47 // pred_check_branch
        %324 = sbr.rel (%p322) target = $region52
      $region51: #{semseg_forward.2} parent=47 // pred_region
        %s325 = smul.u32 2, %s17
        %p326 = scmp.lt.s32.totalorder %s325, 3
        %s327 = scalar_select %p326, %s325, 3
        %s328 = smul.addr %s327, 4
        %s329 = scalar_lea.vmem %s5, %s328
      $region52: #{semseg_forward.2} parent=47 // pred_fallthru
        _
    $region48: #{semseg_forward.2} parent=5 // pred_fallthru
      _
  $region6: #{semseg_forward.2} parent=0 // loop_footer
    %s15 = sadd.s32 1, %s11
  $region7: #{semseg_forward.2} parent=0 // loop_footer_branch
    %10 = sbr.rel target = $region3
  $region8: #{semseg_forward.2} parent=0 // loop_exit
    _

// kernel: semseg_forward.3
$region0: #{semseg_forward.3}
  #allocation0 [shape = 'u32[]', space=smem, size = 0x4, offset = 0x4, fixed_abs, tag = 'smem constant byte address 0x4 - core index']
  #allocation1 [shape = 'u32[72,128]{1,0:T(1,128)}', space=vmem, size = 0x9000, scoped, tag = 'internal scratch']
  %s0 = inlined_call_operand.vmem [shape: bf16[16,4,4], index: 0, kind: input, shape index: {}]
  %s1 = inlined_call_operand.vmem [shape: bf16[16,4], index: 1, kind: input, shape index: {}]
  %s2 = inlined_call_operand.vmem [shape: bf16[4,16], index: 2, kind: input, shape index: {}]
  %s3 = inlined_call_operand.hbm [shape: f32[16,16,16], index: 3, kind: output, shape index: {}]
  %s4 = sld [smem:[#allocation0]]
  $region45: #{semseg_forward.3} parent=0
    _
  %s6 = ssub.s32 1, %s4
  %s7 = scalar_select 0, %s6, %s4
  $region1: #{semseg_forward.3} parent=0
    #allocation2 [shape = 'u8[65536]{0}', space=vmem, size = 0x10000, scoped, tag = 'output window, operand 0']
    #allocation3 [shape = 's32[2]{0}', space=sflag, size = 0x8, scoped, tag = 'scoped memory for semseg_forward.3']
    %8 = vsyncpa [#allocation3], 0
    %s9 = scalar_lea.sflag [#allocation3], 1
    %10 = vsyncpa %s9, 0
    loop: start=0, step=1, limit=6
    $region2: #{semseg_forward.3} parent=1 // loop_pre_header
      _
    $region3: #{semseg_forward.3} parent=1 // loop_header
      %s12 = sphi 0, %s16
      %p13 = scmp.ge.s32.totalorder %s12, 6
      %s19 = sphi 0, %s31
      %s20 = sphi 0, %s27
      %s21 = sphi 0, %s19
      %s22 = sphi 0, %s20
      %s23 = sphi 0, %s21
      %s24 = sphi 0, %s22
      %s34 = sphi 0, %s36
      %s37 = sphi 0, %s34
      %s38 = sphi 0, %s37
      %s54 = sphi 0, %s38
      %s60 = sphi 0, %s62
      %s63 = sphi 0, %s60
      %s64 = sphi 0, %s63
      %s80 = sphi 0, %s64
      %s84 = sphi 0, %s84
      %s86 = sphi 0, %s84
      %s87 = sphi 0, %s86
      %s101 = sphi 0, %s87
      %s109 = sphi 0, %s111
      %s112 = sphi 0, %s109
      %s113 = sphi 0, %s112
      %s129 = sphi 0, %s113
    $region4: #{semseg_forward.3} parent=1 // loop_header_branch
      %15 = sbr.rel (%p13) target = $region8
    $region5: #{semseg_forward.3} parent=1 // loop_body
      %s17 = ssub.s32 %s12, 1
      %s18 = ssub.s32 %s12, 2
      %s25 = sadd.s32 1, %s20
      %p26 = scmp.ge.s32.totalorder %s25, 1
      %s27 = scalar_select %p26, 0, %s25
      %s28 = sadd.s32 1, %s19
      %s29 = scalar_select %p26, %s28, %s19
      %p30 = scmp.ge.s32.totalorder %s29, 4
      %s31 = scalar_select %p30, 0, %s29
      %s32 = ssub.s32 %s19, %s31
      %p33 = scmp.eq.s32.totalorder %s32, 0
      %s35 = sadd.s32 %s34, 1
      %s36 = scalar_select %p33, %s34, %s35
      %p39 = pneg %p33
      %p40 = scmp.eq.s32.totalorder %s12, 3
      %p41 = por %p39, %p40
      %p42 = scmp.ne.s32.totalorder %s34, %s37
      %p43 = scmp.eq.s32.totalorder %s12, 0
      %p44 = por %p42, %p43
      %p45 = scmp.ne.s32.totalorder %s34, %s37
      %p46 = scmp.eq.s32.totalorder %s17, 3
      %p47 = por %p45, %p46
      %p48 = scmp.ne.s32.totalorder %s37, %s38
      %p49 = scmp.eq.s32.totalorder %s17, 0
      %p50 = por %p48, %p49
      %p51 = scmp.ne.s32.totalorder %s37, %s38
      %p52 = scmp.eq.s32.totalorder %s18, 3
      %p53 = por %p51, %p52
      %p55 = scmp.ne.s32.totalorder %s38, %s54
      %p56 = scmp.eq.s32.totalorder %s18, 0
      %p57 = por %p55, %p56
      %s58 = ssub.s32 %s20, %s27
      %p59 = scmp.eq.s32.totalorder %s58, 0
      %s61 = sadd.s32 %s60, 1
      %s62 = scalar_select %p59, %s60, %s61
      %p65 = pneg %p59
      %p66 = scmp.eq.s32.totalorder %s12, 3
      %p67 = por %p65, %p66
      %p68 = scmp.ne.s32.totalorder %s60, %s63
      %p69 = scmp.eq.s32.totalorder %s12, 0
      %p70 = por %p68, %p69
      %p71 = scmp.ne.s32.totalorder %s60, %s63
      %p72 = scmp.eq.s32.totalorder %s17, 3
      %p73 = por %p71, %p72
      %p74 = scmp.ne.s32.totalorder %s63, %s64
      %p75 = scmp.eq.s32.totalorder %s17, 0
      %p76 = por %p74, %p75
      %p77 = scmp.ne.s32.totalorder %s63, %s64
      %p78 = scmp.eq.s32.totalorder %s18, 3
      %p79 = por %p77, %p78
      %p81 = scmp.ne.s32.totalorder %s64, %s80
      %p82 = scmp.eq.s32.totalorder %s18, 0
      %p83 = por %p81, %p82
      %s85 = sadd.s32 %s84, 1
      %p88 = scmp.eq.s32.totalorder %s12, 3
      %p89 = scmp.ne.s32.totalorder %s84, %s86
      %p90 = scmp.eq.s32.totalorder %s12, 0
      %p91 = por %p89, %p90
      %p92 = scmp.ne.s32.totalorder %s84, %s86
      %p93 = scmp.eq.s32.totalorder %s17, 3
      %p94 = por %p92, %p93
      %p95 = scmp.ne.s32.totalorder %s86, %s87
      %p96 = scmp.eq.s32.totalorder %s17, 0
      %p97 = por %p95, %p96
      %p98 = scmp.ne.s32.totalorder %s86, %s87
      %p99 = scmp.eq.s32.totalorder %s18, 3
      %p100 = por %p98, %p99
      %p102 = scmp.ne.s32.totalorder %s87, %s101
      %p103 = scmp.eq.s32.totalorder %s18, 0
      %p104 = por %p102, %p103
      %s105 = ssub.s32 %s19, %s31
      %s106 = ssub.s32 %s20, %s27
      %s107 = sor.u32 %s105, %s106
      %p108 = scmp.eq.s32.totalorder %s107, 0
      %s110 = sadd.s32 %s109, 1
      %s111 = scalar_select %p108, %s109, %s110
      %p114 = pneg %p108
      %p115 = scmp.eq.s32.totalorder %s12, 3
      %p116 = por %p114, %p115
      %p117 = scmp.ne.s32.totalorder %s109, %s112
      %p118 = scmp.eq.s32.totalorder %s12, 0
      %p119 = por %p117, %p118
      %p120 = scmp.ne.s32.totalorder %s109, %s112
      %p121 = scmp.eq.s32.totalorder %s17, 3
      %p122 = por %p120, %p121
      %p123 = scmp.ne.s32.totalorder %s112, %s113
      %p124 = scmp.eq.s32.totalorder %s17, 0
      %p125 = por %p123, %p124
      %p126 = scmp.ne.s32.totalorder %s112, %s113
      %p127 = scmp.eq.s32.totalorder %s18, 3
      %p128 = por %p126, %p127
      %p130 = scmp.ne.s32.totalorder %s113, %s129
      %p131 = scmp.eq.s32.totalorder %s18, 0
      %p132 = por %p130, %p131
      %p133 = scmp.le.s32.totalorder 1, %s12
      %p134 = scmp.lt.s32.totalorder %s12, 5
      %p135 = pnand %p133, %p134
      %p136 = pneg %p135
      // Predicated region
      $region9: #{semseg_forward.3} parent=5 // pred_check
        _
      $region10: #{semseg_forward.3} parent=5 // pred_check_branch
        %138 = sbr.rel (%p135) target = $region12
      $region11: #{semseg_forward.3} parent=5 // pred_region
        %s139 = ssub.s32 %s12, 1
        // Predicated region
        $region13: #{semseg_forward.3} parent=11 // pred_check
          %p140 = pneg %p76
        $region14: #{semseg_forward.3} parent=11 // pred_check_branch
          %142 = sbr.rel (%p140) target = $region16
        $region15: #{semseg_forward.3} parent=11 // pred_region
          %s143 = smul.u32 2, %s22
          %p144 = scmp.lt.s32.totalorder %s143, 1
          %s145 = scalar_select %p144, %s143, 1
          %s146 = smul.addr %s145, 4
          %s147 = scalar_lea.vmem %s1, %s146
          %s148 = smul.u32 2, %s22
        $region16: #{semseg_forward.3} parent=11 // pred_fallthru
          _
        // Predicated region
        $region17: #{semseg_forward.3} parent=11 // pred_check
          %p149 = pneg %p97
        $region18: #{semseg_forward.3} parent=11 // pred_check_branch
          %151 = sbr.rel (%p149) target = $region20
        $region19: #{semseg_forward.3} parent=11 // pred_region
          _
        $region20: #{semseg_forward.3} parent=11 // pred_fallthru
          _
      $region12: #{semseg_forward.3} parent=5 // pred_fallthru
        _
      %p152 = scmp.lt.s32.totalorder %s12, 4
      // Predicated region
      $region21: #{semseg_forward.3} parent=5 // pred_check
        %p153 = pneg %p152
      $region22: #{semseg_forward.3} parent=5 // pred_check_branch
        %155 = sbr.rel (%p153) target = $region24
      $region23: #{semseg_forward.3} parent=5 // pred_region
        // Predicated region
        $region25: #{semseg_forward.3} parent=23 // pred_check
          %p156 = pneg %p44
        $region26: #{semseg_forward.3} parent=23 // pred_check_branch
          %158 = sbr.rel (%p156) target = $region28
        $region27: #{semseg_forward.3} parent=23 // pred_region
          %s159 = smul.u32 4, %s19
          %p160 = scmp.lt.s32.totalorder %s159, 15
          %s161 = scalar_select %p160, %s159, 15
          %s162 = smul.addr %s161, 2
          %s163 = scalar_lea.vmem %s0, %s162
          %s164 = smul.u32 4, %s19
        $region28: #{semseg_forward.3} parent=23 // pred_fallthru
          _
      $region24: #{semseg_forward.3} parent=5 // pred_fallthru
        _
      %p165 = scmp.le.s32.totalorder 1, %s12
      %p166 = scmp.lt.s32.totalorder %s12, 5
      %p167 = pnand %p165, %p166
      %p168 = pneg %p167
      // Predicated region
      $region29: #{semseg_forward.3} parent=5 // pred_check
        _
      $region30: #{semseg_forward.3} parent=5 // pred_check_branch
        %170 = sbr.rel (%p167) target = $region32
      $region31: #{semseg_forward.3} parent=5 // pred_region
        %s171 = ssub.s32 %s12, 1
        %s172 = smul.u32 4, %s21
        %p173 = scmp.lt.s32.totalorder %s172, 15
        %s174 = scalar_select %p173, %s172, 15
        %s175 = smul.addr %s174, 2
        %s176 = scalar_lea.vmem %s0, %s175
        %p177 = pneg %p50
        %p178 = pneg %p47
        %s179 = smul.u32 2, %s22
        %p180 = scmp.lt.s32.totalorder %s179, 1
        %s181 = scalar_select %p180, %s179, 1
        %s182 = smul.addr %s181, 4
        %s183 = scalar_lea.vmem %s1, %s182
        %p184 = pneg %p76
        %p185 = pneg %p73
        %p186 = pneg %p97
        %p187 = pneg %p94
        %p188 = pneg %p125
        %p189 = pneg %p122
        %s190 = sand.u32 %s112, 1
        %s191 = scalar_lea.sflag [#allocation3], %s190
        %s192 = sand.u32 %s112, 1
        %s193 = smul.addr %s192, 64
        %s194 = scalar_lea.vmem [#allocation2], %s193
        %s195 = smul.u32 4, %s21
        %p196 = scmp.lt.s32.totalorder %s195, 15
        %s197 = scalar_select %p196, %s195, 15
        %s198 = smul.addr %s197, 2
        %s199 = scalar_lea.vmem %s0, %s198
        %s200 = smul.u32 4, %s21
        %s201 = smul.u32 2, %s22
        %p202 = scmp.lt.s32.totalorder %s201, 1
        %s203 = scalar_select %p202, %s201, 1
        %s204 = smul.addr %s203, 4
        %s205 = scalar_lea.vmem %s1, %s204
        %s206 = smul.u32 2, %s22
        %s207 = smul.u32 4, %s21
        %s208 = smul.u32 2, %s22
        %v210 = vld [vmem:[%s205] sm:$0xf]
        %v211 = vld [vmem:[%s205 + $0x4] sm:$0xf]
        %v212 = vld [vmem:[%s199] sm:$0x3]
        %v215 = vunpack.c.l.b16 %v210
        %v216 = vunpack.c.l.b16 %v211
        %v217 = vpack.c.b16 %v216, %v215
        %vm218 = vcmask 31744
        %v220 = vsel %vm218, %v217, 0
        %vm222 = vcmask 1041408
        %v224 = vsel %vm222, %v212, 0
        %226 = vmatpush.bf16.msra.mxu0 0
        %227 = vmatpush.bf16.msra.mxu0 0
        %228 = vmatpush.bf16.msra.mxu0 0
        %229 = vmatpush.bf16.msra.mxu0 0
        %230 = vmatpush.bf16.msra.mxu0 0
        %231 = vmatpush.bf16.msra.mxu0 0
        %232 = vmatpush.bf16.msra.mxu0 0
        %233 = vmatpush.bf16.msra.mxu0 %v224
        %234 = vmatmul.bf16.gmra.mxu0 %v220
        %v235 = vpop.f32.mrf.mxu0
        %v236 = vadd.f32 0.0, %v235
        %v237 = vpop.f32.mrf.mxu0
        %v238 = vadd.f32 0.0, %v237
        %239 = vdwg.mxu0
        %v240 = vpack.c.bf16 %v236, %v236
        %v241 = vpack.c.bf16 %v238, %v238
        %s242 = scalar_lea.vmem %s199, 2
        %v243 = vld [vmem:[%s242] sm:$0x3]
        %v245 = vsel %vm222, %v243, 0
        %247 = vmatpush.bf16.msra.mxu0 0
        %248 = vmatpush.bf16.msra.mxu0 0
        %249 = vmatpush.bf16.msra.mxu0 0
        %250 = vmatpush.bf16.msra.mxu0 0
        %251 = vmatpush.bf16.msra.mxu0 0
        %252 = vmatpush.bf16.msra.mxu0 0
        %253 = vmatpush.bf16.msra.mxu0 0
        %254 = vmatpush.bf16.msra.mxu0 %v245
        %255 = vmatmul.bf16.gmra.mxu0 %v220
        %v256 = vpop.f32.mrf.mxu0
        %v257 = vadd.f32 0.0, %v256
        %v258 = vpop.f32.mrf.mxu0
        %v259 = vadd.f32 0.0, %v258
        %260 = vdwg.mxu0
        %v261 = vpack.c.bf16 %v257, %v257
        %v262 = vpack.c.bf16 %v259, %v259
        %s263 = scalar_lea.vmem %s199, 4
        %v264 = vld [vmem:[%s263] sm:$0x3]
        %v266 = vsel %vm222, %v264, 0
        %268 = vmatpush.bf16.msra.mxu0 0
        %269 = vmatpush.bf16.msra.mxu0 0
        %270 = vmatpush.bf16.msra.mxu0 0
        %271 = vmatpush.bf16.msra.mxu0 0
        %272 = vmatpush.bf16.msra.mxu0 0
        %273 = vmatpush.bf16.msra.mxu0 0
        %274 = vmatpush.bf16.msra.mxu0 0
        %275 = vmatpush.bf16.msra.mxu0 %v266
        %276 = vmatmul.bf16.gmra.mxu0 %v220
        %v277 = vpop.f32.mrf.mxu0
        %v278 = vadd.f32 0.0, %v277
        %v279 = vpop.f32.mrf.mxu0
        %v280 = vadd.f32 0.0, %v279
        %281 = vdwg.mxu0
        %v282 = vpack.c.bf16 %v278, %v278
        %v283 = vpack.c.bf16 %v280, %v280
        %s284 = scalar_lea.vmem %s199, 6
        %v285 = vld [vmem:[%s284] sm:$0x3]
        %v287 = vsel %vm222, %v285, 0
        %289 = vmatpush.bf16.msra.mxu0 0
        %290 = vmatpush.bf16.msra.mxu0 0
        %291 = vmatpush.bf16.msra.mxu0 0
        %292 = vmatpush.bf16.msra.mxu0 0
        %293 = vmatpush.bf16.msra.mxu0 0
        %294 = vmatpush.bf16.msra.mxu0 0
        %295 = vmatpush.bf16.msra.mxu0 0
        %296 = vmatpush.bf16.msra.mxu0 %v287
        %297 = vmatmul.bf16.gmra.mxu0 %v220
        %v298 = vpop.f32.mrf.mxu0
        %v299 = vadd.f32 0.0, %v298
        %v300 = vpop.f32.mrf.mxu0
        %v301 = vadd.f32 0.0, %v300
        %302 = vdwg.mxu0
        %v303 = vpack.c.bf16 %v299, %v299
        %v304 = vpack.c.bf16 %v301, %v301
        %v307 = vunpack.c.l.b16 %v240
        %v308 = vunpack.c.l.b16 %v241
        %v309 = vpack.c.b16 %v308, %v307
        %v312 = vunpack.c.l.b16 %v261
        %v313 = vunpack.c.l.b16 %v262
        %v314 = vpack.c.b16 %v313, %v312
        %v317 = vunpack.c.l.b16 %v282
        %v318 = vunpack.c.l.b16 %v283
        %v319 = vpack.c.b16 %v318, %v317
        %v322 = vunpack.c.l.b16 %v303
        %v323 = vunpack.c.l.b16 %v304
        %v324 = vpack.c.b16 %v323, %v322
        %v325 = vld [vmem:[%s2] sm:$0x3]
        %v327 = vsel %vm218, %v309, 0
        %v330 = vsel %vm218, %v314, 0
        %v333 = vsel %vm218, %v319, 0
        %v336 = vsel %vm218, %v324, 0
        %v339 = vsel %vm222, %v325, 0
        %341 = vmatpush.bf16.msra.mxu0 0
        %342 = vmatpush.bf16.msra.mxu0 0
        %343 = vmatpush.bf16.msra.mxu0 0
        %344 = vmatpush.bf16.msra.mxu0 0
        %345 = vmatpush.bf16.msra.mxu0 0
        %346 = vmatpush.bf16.msra.mxu0 0
        %347 = vmatpush.bf16.msra.mxu0 0
        %348 = vmatpush.bf16.msra.mxu0 %v339
        %349 = vmatmul.bf16.gmra.mxu0 %v327
        %v350 = vpop.f32.mrf.mxu0
        %v351 = vadd.f32 0.0, %v350
        %v352 = vpop.f32.mrf.mxu0
        %v353 = vadd.f32 0.0, %v352
        %354 = vmatmul.bf16.gmra.mxu0 %v330
        %v355 = vpop.f32.mrf.mxu0
        %v356 = vadd.f32 0.0, %v355
        %v357 = vpop.f32.mrf.mxu0
        %v358 = vadd.f32 0.0, %v357
        %359 = vmatmul.bf16.gmra.mxu0 %v333
        %v360 = vpop.f32.mrf.mxu0
        %v361 = vadd.f32 0.0, %v360
        %v362 = vpop.f32.mrf.mxu0
        %v363 = vadd.f32 0.0, %v362
        %364 = vmatmul.bf16.gmra.mxu0 %v336
        %v365 = vpop.f32.mrf.mxu0
        %v366 = vadd.f32 0.0, %v365
        %v367 = vpop.f32.mrf.mxu0
        %v368 = vadd.f32 0.0, %v367
        %369 = vdwg.mxu0
        %vm370 = vcmask 130048
        %371 = vst.msk [vmem:[%s194] sm:$0xff] %vm370, %v351
        %372 = vst.msk [vmem:[%s194 + $0x8] sm:$0xff] %vm370, %v353
        %373 = vst.msk [vmem:[%s194 + $0x10] sm:$0xff] %vm370, %v356
        %374 = vst.msk [vmem:[%s194 + $0x18] sm:$0xff] %vm370, %v358
        %375 = vst.msk [vmem:[%s194 + $0x20] sm:$0xff] %vm370, %v361
        %376 = vst.msk [vmem:[%s194 + $0x28] sm:$0xff] %vm370, %v363
        %377 = vst.msk [vmem:[%s194 + $0x30] sm:$0xff] %vm370, %v366
        %378 = vst.msk [vmem:[%s194 + $0x38] sm:$0xff] %vm370, %v368
        %s379 = sand.u32 %s112, 1
        %s380 = scalar_lea.sflag [#allocation3], %s379
        %s381 = sand.u32 %s112, 1
        %s382 = smul.addr %s381, 64
        %s383 = scalar_lea.vmem [#allocation2], %s382
        // Predicated region
        $region33: #{semseg_forward.3} parent=31 // pred_check
          %p384 = pneg %p122
        $region34: #{semseg_forward.3} parent=31 // pred_check_branch
          %386 = sbr.rel (%p384) target = $region36
        $region35: #{semseg_forward.3} parent=31 // pred_region
          %s387 = smul.u32 4, %s21
          %s388 = smul.u32 2, %s22
          %390 = vsyncadd %s380, 0
          %s391 = smul.addr %s387, 2
          %s392 = sadd.s32 %s388, %s391
          %s393 = smul.addr %s392, 8
          %s394 = scalar_lea.hbm %s3, %s393
          %s395 = sshll.u32 %s383, 4
          %s396 = int_to_ptr.vmem [resolvable:$true] %s395
          %s397 = sshll.u32 %s394, 4
          %s398 = int_to_ptr.hbm [resolvable:$true] %s397
          %403 = dma.vmem_to_hbm [thread:$0]  %s396, 1024, %s398, %s380, 128, 128, 8
        $region36: #{semseg_forward.3} parent=31 // pred_fallthru
          _
      $region32: #{semseg_forward.3} parent=5 // pred_fallthru
        _
      %p404 = scmp.le.s32.totalorder 2, %s12
      // Predicated region
      $region37: #{semseg_forward.3} parent=5 // pred_check
        %p405 = pneg %p404
      $region38: #{semseg_forward.3} parent=5 // pred_check_branch
        %407 = sbr.rel (%p405) target = $region40
      $region39: #{semseg_forward.3} parent=5 // pred_region
        %s408 = ssub.s32 %s12, 2
        // Predicated region
        $region41: #{semseg_forward.3} parent=39 // pred_check
          %p409 = pneg %p128
        $region42: #{semseg_forward.3} parent=39 // pred_check_branch
          %411 = sbr.rel (%p409) target = $region44
        $region43: #{semseg_forward.3} parent=39 // pred_region
          %s412 = sand.u32 %s113, 1
          %s413 = scalar_lea.sflag [#allocation3], %s412
          %s414 = sand.u32 %s113, 1
          %s415 = smul.addr %s414, 64
          %s416 = scalar_lea.vmem [#allocation2], %s415
          %418 = dma.done %s413, 1024
        $region44: #{semseg_forward.3} parent=39 // pred_fallthru
          _
      $region40: #{semseg_forward.3} parent=5 // pred_fallthru
        _
    $region6: #{semseg_forward.3} parent=1 // loop_footer
      %s16 = sadd.s32 1, %s12
    $region7: #{semseg_forward.3} parent=1 // loop_footer_branch
      %11 = sbr.rel target = $region3
    $region8: #{semseg_forward.3} parent=1 // loop_exit
      _
    %419 = vsyncpa [#allocation3], 1
    %s420 = scalar_lea.sflag [#allocation3], 1
    %421 = vsyncpa %s420, 1

</llo_original>
